<compile_context>
chip_gen: v7x
topology: tpu7x:2x2x1
jax: 0.10.0
libtpu: 0.0.40
codegen_flags: <defaults>
</compile_context>

<pallas_src>
import functools

import jax
import jax.numpy as jnp
from jax.experimental import pallas as pl
from jax.experimental.pallas import tpu as pltpu


def _round_up(x: int, m: int) -> int:
    return ((x + m - 1) // m) * m


def _sublane_multiple(dtype) -> int:
    """Minimum second-to-last tile multiple for the given dtype."""
    itemsize = jnp.dtype(dtype).itemsize
    return {4: 8, 2: 16, 1: 32}.get(itemsize, 8)


def _vmem_budget_bytes() -> int:
    """Per-generation scoped-VMEM budget (limit passed to the compiler)."""
    try:
        cap = int(pltpu.get_tpu_info().vmem_capacity_bytes)
    except Exception:
        cap = 64 << 20  # conservative fallback (v7x physical VMEM)
    # ~96 MiB on 128-MiB chips (v5e/v6e), ~48 MiB on v7x (64 MiB physical).
    return max(min((cap * 3) // 4, 100 << 20), 16 << 20)


def _tile_bytes(tm: int, tn: int, tk: int, cbytes: int, obytes: int) -> int:
    """VMEM footprint of one grid step (double-buffered tiles + f32 acc)."""
    return (
        2 * (tm * tk + tk * tn) * cbytes  # double-buffered x / w tiles
        + 2 * tn * 4                      # double-buffered f32 bias tile
        + 2 * tm * tn * obytes            # double-buffered output tile
        + tm * tn * 4                     # f32 accumulator scratch
    )


def _plan_kn_tiles(K, N, compute_dtype, out_dtype, *,
                   tm_cap=512, tn_cap=512, tk_cap=None):
    """Pick (tn, tk), padded (Kp, Np) and the VMEM limit from K/N alone
    (independent of batch, so weights can be pre-padded once in __init__)."""
    cbytes = jnp.dtype(compute_dtype).itemsize
    obytes = jnp.dtype(out_dtype).itemsize
    vmem_limit = _vmem_budget_bytes()
    tile_budget = vmem_limit // 2  # leave half the budget as compiler headroom

    tn = min(tn_cap, _round_up(N, 128))
    kp_full = _round_up(K, 128)
    tk = kp_full if tk_cap is None else min(_round_up(tk_cap, 128), kp_full)

    def fits(tk_, tn_):
        return _tile_bytes(tm_cap, tn_, tk_, cbytes, obytes) <= tile_budget

    # Shrink the K tile first (keeps the output tile lane-dense/wide), then N.
    while not fits(tk, tn) and tk > 128:
        tk = max(128, ((tk // 2) // 128) * 128)
    while not fits(tk, tn) and tn > 128:
        tn = max(128, ((tn // 2) // 128) * 128)

    Kp = _round_up(K, tk)
    Np = _round_up(N, tn)
    return tn, tk, Kp, Np, vmem_limit


def _plan_m_tile(B, compute_dtype, n_blocks_n, *, tm_cap=512):
    """Per-call M tile; split once if needed so (M blocks * N blocks) >= 2
    (feeds both v7x TensorCores; costs one extra grid step elsewhere)."""
    sub = _sublane_multiple(compute_dtype)
    tm = min(tm_cap, _round_up(B, sub))
    Mp = _round_up(B, tm)
    if (Mp // tm) * n_blocks_n < 2:
        tm_half = _round_up(max(tm // 2, sub), sub)
        if sub <= tm_half < tm and B > tm_half:
            tm = tm_half
            Mp = _round_up(B, tm)
    return tm, Mp


# ----------------------------- kernels --------------------------------------


def _affine_kernel_single_k(x_ref, w_ref, b_ref, o_ref):
    """Whole reduction fits in one K tile: no scratch, no predication."""
    acc = jnp.dot(x_ref[...], w_ref[...], preferred_element_type=jnp.float32)
    o_ref[...] = (acc + b_ref[...].astype(jnp.float32)).astype(o_ref.dtype)


def _affine_kernel_multi_k(x_ref, w_ref, b_ref, o_ref, acc_ref):
    """Grid axis 2 is the K reduction; f32 accumulator in VMEM."""
    k = pl.program_id(2)

    @pl.when(k == 0)
    def _init():
        acc_ref[...] = jnp.zeros_like(acc_ref)

    acc_ref[...] += jnp.dot(
        x_ref[...], w_ref[...], preferred_element_type=jnp.float32
    )

    @pl.when(k == pl.num_programs(2) - 1)
    def _finalize():
        o_ref[...] = (acc_ref[...] + b_ref[...].astype(jnp.float32)).astype(
            o_ref.dtype
        )


# -------------------------- pallas_call wrapper ------------------------------


@functools.partial(jax.jit, static_argnames=("tm", "tn", "tk", "vmem_limit"))
def _affine_padded(xp, wp, bp, *, tm, tn, tk, vmem_limit):
    """xp:[Mp,Kp] (compute dtype), wp:[Kp,Np] (compute dtype), bp:[1,Np] f32."""
    Mp, Kp = xp.shape
    Np = wp.shape[1]
    out_dtype = bp.dtype
    grid_m, grid_n, grid_k = Mp // tm, Np // tn, Kp // tk

    cbytes = jnp.dtype(xp.dtype).itemsize
    cost = pl.CostEstimate(
        flops=2 * Mp * Np * Kp,
        transcendentals=0,
        bytes_accessed=(Mp * Kp * cbytes + Kp * Np * cbytes + Np * 4
                        + Mp * Np * jnp.dtype(out_dtype).itemsize),
    )

    if grid_k == 1:
        return pl.pallas_call(
            _affine_kernel_single_k,
            out_shape=jax.ShapeDtypeStruct((Mp, Np), out_dtype),
            grid_spec=pltpu.PrefetchScalarGridSpec(
                num_scalar_prefetch=0,
                grid=(grid_m, grid_n),
                in_specs=[
                    pl.BlockSpec((tm, tk), lambda i, j: (i, 0)),
                    pl.BlockSpec((tk, tn), lambda i, j: (0, j)),
                    pl.BlockSpec((1, tn), lambda i, j: (0, j)),
                ],
                out_specs=pl.BlockSpec((tm, tn), lambda i, j: (i, j)),
            ),
            compiler_params=pltpu.CompilerParams(
                dimension_semantics=("parallel", "parallel"),
                vmem_limit_bytes=vmem_limit,
            ),
            cost_estimate=cost,
        )(xp, wp, bp)

    return pl.pallas_call(
        _affine_kernel_multi_k,
        out_shape=jax.ShapeDtypeStruct((Mp, Np), out_dtype),
        grid_spec=pltpu.PrefetchScalarGridSpec(
            num_scalar_prefetch=0,
            grid=(grid_m, grid_n, grid_k),
            in_specs=[
                pl.BlockSpec((tm, tk), lambda i, j, k: (i, k)),
                pl.BlockSpec((tk, tn), lambda i, j, k: (k, j)),
                pl.BlockSpec((1, tn), lambda i, j, k: (0, j)),
            ],
            out_specs=pl.BlockSpec((tm, tn), lambda i, j, k: (i, j)),
            scratch_shapes=[pltpu.VMEM((tm, tn), jnp.float32)],
        ),
        compiler_params=pltpu.CompilerParams(
            dimension_semantics=("parallel", "parallel", "arbitrary"),
            vmem_limit_bytes=vmem_limit,
        ),
        cost_estimate=cost,
    )(xp, wp, bp)


def nnbase_forward_pallas(x, w, b, *, compute_dtype=jnp.bfloat16,
                          tn_cap=512, tk_cap=None):
    """General entry: x:[B,K], w:[K,N], b:[1,N] -> [B,N] (pads per call)."""
    B, K = x.shape
    N = w.shape[1]
    tn, tk, Kp, Np, vmem_limit = _plan_kn_tiles(
        K, N, compute_dtype, jnp.float32, tn_cap=tn_cap, tk_cap=tk_cap
    )
    tm, Mp = _plan_m_tile(B, compute_dtype, Np // tn)

    xp = x.astype(compute_dtype)
    if Mp != B or Kp != K:
        xp = jnp.pad(xp, ((0, Mp - B), (0, Kp - K)))
    wp = w.astype(compute_dtype)
    if Kp != K or Np != N:
        wp = jnp.pad(wp, ((0, Kp - K), (0, Np - N)))
    bp = b.astype(jnp.float32)
    if Np != N:
        bp = jnp.pad(bp, ((0, 0), (0, Np - N)))

    out = _affine_padded(xp, wp, bp, tm=tm, tn=tn, tk=tk,
                         vmem_limit=vmem_limit)
    return out[:B, :N]


class NNBaseJax:
    """JAX mirror of NNBase: holds dim_in/dim_out and the implied affine map."""

    def __init__(self, dim_in, dim_out, cuda=False, compute_dtype=jnp.bfloat16):
        self.dim_in = dim_in
        self.dim_out = dim_out
        # `cuda` flag has no meaning here; device placement is handled by JAX.
        self._device = jax.devices()[0]
        self._compute_dtype = jnp.dtype(compute_dtype)

        kw, kb = jax.random.split(jax.random.PRNGKey(42))
        bound = 1.0 / (dim_in ** 0.5)
        self.w = jax.random.uniform(
            kw, (dim_in, dim_out), jnp.float32, minval=-bound, maxval=bound
        )
        self.b = jax.random.uniform(
            kb, (1, dim_out), jnp.float32, minval=-bound, maxval=bound
        )

        # Tile plan + pre-padded, pre-cast MXU operands (hoisted out of
        # forward(): avoids a full HBM round-trip of W on every call).
        (self._tn, self._tk, self._Kp, self._Np,
         self._vmem_limit) = _plan_kn_tiles(
            dim_in, dim_out, self._compute_dtype, jnp.float32
        )
        self._wp = self.w.astype(self._compute_dtype)
        if self._Kp != dim_in or self._Np != dim_out:
            self._wp = jnp.pad(
                self._wp, ((0, self._Kp - dim_in), (0, self._Np - dim_out))
            )
        self._bp = self.b
        if self._Np != dim_out:
            self._bp = jnp.pad(self._bp, ((0, 0), (0, self._Np - dim_out)))

    @property
    def device(self):
        return self._device

    def forward(self, x):
        B = x.shape[0]
        tm, Mp = _plan_m_tile(B, self._compute_dtype, self._Np // self._tn)
        xp = x.astype(self._compute_dtype)
        if Mp != B or self._Kp != self.dim_in:
            xp = jnp.pad(xp, ((0, Mp - B), (0, self._Kp - self.dim_in)))
        out = _affine_padded(
            xp, self._wp, self._bp,
            tm=tm, tn=self._tn, tk=self._tk, vmem_limit=self._vmem_limit,
        )
        return out[:B, :self.dim_out]

    def predict(self, x):
        return self.forward(x)


if __name__ == "__main__":
    hi = jax.lax.Precision.HIGHEST

    # --- Small demo consistent with the module interface (bf16 MXU path) ----
    batch, dim_in, dim_out = 8, 32, 32
    key = jax.random.PRNGKey(0)
    x = jax.random.normal(key, (batch, dim_in), dtype=jnp.float32)

    model = NNBaseJax(dim_in, dim_out, cuda=False)
    out = model.forward(x)
    jax.block_until_ready(out)
    ref = jnp.dot(x, model.w, precision=hi) + model.b
    assert out.shape == (batch, dim_out)
    assert jnp.allclose(out, ref, atol=1e-2, rtol=1e-2)

    # --- f32-operand path, tight tolerance, exercises M/N tiling ------------
    k1, k2, k3 = jax.random.split(jax.random.PRNGKey(1), 3)
    B2, K2, N2 = 384, 512, 384
    x2 = jax.random.normal(k1, (B2, K2), dtype=jnp.float32)
    w2 = jax.random.normal(k2, (K2, N2), dtype=jnp.float32) * 0.05
    b2 = jax.random.normal(k3, (1, N2), dtype=jnp.float32)
    out2 = nnbase_forward_pallas(x2, w2, b2, compute_dtype=jnp.float32)
    jax.block_until_ready(out2)
    ref2 = jnp.dot(x2, w2, precision=hi) + b2
    assert jnp.allclose(out2, ref2, atol=1e-3, rtol=1e-3)

    # --- Multi-step K reduction path (acc scratch + pl.when init/finalize) --
    k4, k5, k6 = jax.random.split(jax.random.PRNGKey(2), 3)
    B3, K3, N3 = 64, 384, 256
    x3 = jax.random.normal(k4, (B3, K3), dtype=jnp.float32)
    w3 = jax.random.normal(k5, (K3, N3), dtype=jnp.float32) * 0.05
    b3 = jax.random.normal(k6, (1, N3), dtype=jnp.float32)
    out3 = nnbase_forward_pallas(x3, w3, b3, compute_dtype=jnp.float32,
                                 tn_cap=128, tk_cap=128)
    jax.block_until_ready(out3)
    ref3 = jnp.dot(x3, w3, precision=hi) + b3
    assert jnp.allclose(out3, ref3, atol=1e-3, rtol=1e-3)

    print("KERNEL_OK")
</pallas_src>

<mosaic_0001>
module attributes {stable_mosaic.version = 11 : i64} {
  func.func @_affine_kernel_single_k(%arg0: i32, %arg1: i32, %arg2: memref<16x128xbf16, #tpu.memory_space<vmem>>, %arg3: memref<128x128xbf16, #tpu.memory_space<vmem>>, %arg4: memref<1x128xf32, #tpu.memory_space<vmem>>, %arg5: memref<16x128xf32, #tpu.memory_space<vmem>>) attributes {dimension_semantics = [#tpu.dimension_semantics<parallel>, #tpu.dimension_semantics<parallel>], iteration_bounds = array<i64: 1, 1>, scalar_prefetch = 0 : i64, scratch_operands = 0 : i64, tpu.core_type = #tpu.core_type<tc>, window_params = [{transform_indices = @transform_0, window_bounds = array<i64: 16, 128>}, {transform_indices = @transform_1, window_bounds = array<i64: 128, 128>}, {transform_indices = @transform_2, window_bounds = array<i64: 1, 128>}, {transform_indices = @transform_3, window_bounds = array<i64: 16, 128>}]} {
    %c0 = arith.constant 0 : index
    %c0_0 = arith.constant 0 : index
    %0 = vector.load %arg2[%c0, %c0_0] : memref<16x128xbf16, #tpu.memory_space<vmem>>, vector<16x128xbf16>
    %c0_1 = arith.constant 0 : index
    %c0_2 = arith.constant 0 : index
    %1 = vector.load %arg3[%c0_1, %c0_2] : memref<128x128xbf16, #tpu.memory_space<vmem>>, vector<128x128xbf16>
    %cst = arith.constant dense<0.000000e+00> : vector<16x128xf32>
    %2 = tpu.matmul %0, %1, %cst {dimension_numbers = #tpu.dot_dimension_numbers<[1], [0], [0], [1], [0, 0, 1, 1], [], []>} : vector<16x128xbf16>, vector<128x128xbf16>, vector<16x128xf32> -> vector<16x128xf32>
    %c0_3 = arith.constant 0 : index
    %c0_4 = arith.constant 0 : index
    %3 = vector.load %arg4[%c0_3, %c0_4] : memref<1x128xf32, #tpu.memory_space<vmem>>, vector<1x128xf32>
    %4 = vector.broadcast %3 : vector<1x128xf32> to vector<16x128xf32>
    %5 = arith.addf %2, %4 : vector<16x128xf32>
    %c0_5 = arith.constant 0 : index
    %c0_6 = arith.constant 0 : index
    %6 = vector.load %arg5[%c0_5, %c0_6] : memref<16x128xf32, #tpu.memory_space<vmem>>, vector<16x128xf32>
    tpu.vector_store %arg5[%c0_5, %c0_6], %5 {strides = array<i32>} : memref<16x128xf32, #tpu.memory_space<vmem>>, vector<16x128xf32>,
    return
  }
  func.func @transform_0(%arg0: i32, %arg1: i32) -> (i32, i32) {
    %c0_i32 = arith.constant 0 : i32
    %c0_i32_0 = arith.constant 0 : i32
    return %arg0, %c0_i32 : i32, i32
  }
  func.func @transform_1(%arg0: i32, %arg1: i32) -> (i32, i32) {
    %c0_i32 = arith.constant 0 : i32
    %c0_i32_0 = arith.constant 0 : i32
    return %c0_i32, %arg1 : i32, i32
  }
  func.func @transform_2(%arg0: i32, %arg1: i32) -> (i32, i32) {
    %c0_i32 = arith.constant 0 : i32
    %c0_i32_0 = arith.constant 0 : i32
    return %c0_i32, %arg1 : i32, i32
  }
  func.func @transform_3(%arg0: i32, %arg1: i32) -> (i32, i32) {
    %c0_i32 = arith.constant 0 : i32
    return %arg0, %arg1 : i32, i32
  }
}

</mosaic_0001>

<llo_original>
// kernel: _affine_padded.1
$region0: #{_affine_padded.1}
  #allocation0 [shape = 'u32[]', space=smem, size = 0x4, offset = 0x4, fixed_abs, tag = 'smem constant byte address 0x4 - core index']
  #allocation1 [shape = 'u32[144,128]{1,0:T(1,128)}', space=vmem, size = 0x12000, scoped, tag = 'internal scratch']
  %s0 = inlined_call_operand.hbm [shape: bf16[16,128], index: 0, kind: input, shape index: {}]
  %s1 = inlined_call_operand.hbm [shape: bf16[128,128], index: 1, kind: input, shape index: {}]
  %s2 = inlined_call_operand.vmem [shape: f32[1,128], index: 2, kind: input, shape index: {}]
  %s3 = inlined_call_operand.hbm [shape: f32[16,128], index: 3, kind: output, shape index: {}]
  %s4 = sld [smem:[#allocation0]]
  $region30: #{_affine_padded.1} parent=0
    _
  %s6 = ssub.s32 1, %s4
  %s7 = scalar_select 0, %s6, %s4
  $region1: #{_affine_padded.1} parent=0
    #allocation2 [shape = 'u8[4096]{0}', space=vmem, size = 0x1000, scoped, tag = 'input window, operand 0, single buffered']
    #allocation3 [shape = 's32[1]{0}', space=sflag, size = 0x4, scoped, tag = 'scoped memory for _affine_padded.1']
    #allocation4 [shape = 's32[1]{0}', space=sflag, size = 0x4, scoped, tag = 'scoped memory for _affine_padded.1']
    #allocation5 [shape = 'u8[32768]{0}', space=vmem, size = 0x8000, scoped, tag = 'input window, operand 1, single buffered']
    #allocation6 [shape = 's32[1]{0}', space=sflag, size = 0x4, scoped, tag = 'scoped memory for _affine_padded.1']
    #allocation7 [shape = 'u8[8192]{0}', space=vmem, size = 0x2000, scoped, tag = 'output window, operand 0, single buffered']
    %8 = vsyncpa [#allocation3], 0
    %9 = vsyncpa [#allocation6], 0
    %10 = vsyncpa [#allocation4], 0
    // Predicated region
    $region2: #{_affine_padded.1} parent=1 // pred_check
      _
    $region3: #{_affine_padded.1} parent=1 // pred_check_branch
      %12 = sbr.rel (0) target = $region5
    $region4: #{_affine_padded.1} parent=1 // pred_region
      %s14 = ssub.s32 128, 128
      %15 = vsyncadd [#allocation3], %s14
      %s16 = sshll.u32 [#allocation2], 4
      %s17 = int_to_ptr.vmem [resolvable:$true] %s16
      %22 = dma.hbm_to_vmem [thread:$0]  %s0, 128, %s17, [#allocation3], 64, 64, 4
    $region5: #{_affine_padded.1} parent=1 // pred_fallthru
      _
    // Predicated region
    $region6: #{_affine_padded.1} parent=1 // pred_check
      _
    $region7: #{_affine_padded.1} parent=1 // pred_check_branch
      %24 = sbr.rel (0) target = $region9
    $region8: #{_affine_padded.1} parent=1 // pred_region
      %s26 = ssub.s32 1024, 1024
      %27 = vsyncadd [#allocation6], %s26
      %s28 = sshll.u32 [#allocation5], 4
      %s29 = int_to_ptr.vmem [resolvable:$true] %s28
      %34 = dma.hbm_to_vmem [thread:$0]  %s1, 1024, %s29, [#allocation6], 64, 64, 4
    $region9: #{_affine_padded.1} parent=1 // pred_fallthru
      _
    // Predicated region
    $region10: #{_affine_padded.1} parent=1 // pred_check
      _
    $region11: #{_affine_padded.1} parent=1 // pred_check_branch
      %36 = sbr.rel (0) target = $region13
    $region12: #{_affine_padded.1} parent=1 // pred_region
      _
    $region13: #{_affine_padded.1} parent=1 // pred_fallthru
      _
    // Predicated region
    $region14: #{_affine_padded.1} parent=1 // pred_check
      _
    $region15: #{_affine_padded.1} parent=1 // pred_check_branch
      %38 = sbr.rel (0) target = $region17
    $region16: #{_affine_padded.1} parent=1 // pred_region
      %39 = dma.done [#allocation3], 128
    $region17: #{_affine_padded.1} parent=1 // pred_fallthru
      _
    // Predicated region
    $region18: #{_affine_padded.1} parent=1 // pred_check
      _
    $region19: #{_affine_padded.1} parent=1 // pred_check_branch
      %41 = sbr.rel (0) target = $region21
    $region20: #{_affine_padded.1} parent=1 // pred_region
      %42 = dma.done [#allocation6], 1024
    $region21: #{_affine_padded.1} parent=1 // pred_fallthru
      _
    %v44 = vld [vmem:[#allocation2] sm:$0xf]
    %v45 = vld [vmem:[#allocation2 + $0x4] sm:$0xf]
    %v46 = vld [vmem:[#allocation5] sm:$0xf]
    %v47 = vld [vmem:[#allocation5 + $0x4] sm:$0xf]
    %v48 = vld [vmem:[#allocation5 + $0x8] sm:$0xf]
    %v49 = vld [vmem:[#allocation5 + $0xc] sm:$0xf]
    %v50 = vld [vmem:[#allocation5 + $0x10] sm:$0xf]
    %v51 = vld [vmem:[#allocation5 + $0x14] sm:$0xf]
    %v52 = vld [vmem:[#allocation5 + $0x18] sm:$0xf]
    %v53 = vld [vmem:[#allocation5 + $0x1c] sm:$0xf]
    %v54 = vld [vmem:[#allocation5 + $0x20] sm:$0xf]
    %v55 = vld [vmem:[#allocation5 + $0x24] sm:$0xf]
    %v56 = vld [vmem:[#allocation5 + $0x28] sm:$0xf]
    %v57 = vld [vmem:[#allocation5 + $0x2c] sm:$0xf]
    %v58 = vld [vmem:[#allocation5 + $0x30] sm:$0xf]
    %v59 = vld [vmem:[#allocation5 + $0x34] sm:$0xf]
    %v60 = vld [vmem:[#allocation5 + $0x38] sm:$0xf]
    %v61 = vld [vmem:[#allocation5 + $0x3c] sm:$0xf]
    %v62 = vld [vmem:[%s2] sm:$0x1]
    %v64 = vlaneseq
    %v65 = vshrl.u32 %v64, 7
    %v66 = vsub.s32 0, %v65
    %v67 = vrot.slane %v62, %v66
    %v71 = vunpack.c.l.b16 %v44
    %v72 = vunpack.c.l.b16 %v45
    %v73 = vpack.c.b16 %v72, %v71
    %v91 = vunpack.c.l.b16 %v46
    %v92 = vunpack.c.l.b16 %v47
    %v93 = vunpack.c.l.b16 %v48
    %v94 = vunpack.c.l.b16 %v49
    %v95 = vunpack.c.l.b16 %v50
    %v96 = vunpack.c.l.b16 %v51
    %v97 = vunpack.c.l.b16 %v52
    %v98 = vunpack.c.l.b16 %v53
    %v99 = vunpack.c.l.b16 %v54
    %v100 = vunpack.c.l.b16 %v55
    %v101 = vunpack.c.l.b16 %v56
    %v102 = vunpack.c.l.b16 %v57
    %v103 = vunpack.c.l.b16 %v58
    %v104 = vunpack.c.l.b16 %v59
    %v105 = vunpack.c.l.b16 %v60
    %v106 = vunpack.c.l.b16 %v61
    %v107 = vpack.c.b16 %v92, %v91
    %v108 = vpack.c.b16 %v94, %v93
    %v109 = vpack.c.b16 %v96, %v95
    %v110 = vpack.c.b16 %v98, %v97
    %v111 = vpack.c.b16 %v100, %v99
    %v112 = vpack.c.b16 %v102, %v101
    %v113 = vpack.c.b16 %v104, %v103
    %v114 = vpack.c.b16 %v106, %v105
    %123 = vmatprep.subr.bf16.mxu0 0
    %124 = vmatpush1.bf16.msra.mxu0 %v107
    %125 = vmatprep.subr.bf16.mxu0 0
    %126 = vmatpush1.bf16.msra.mxu0 %v108
    %127 = vmatprep.subr.bf16.mxu0 0
    %128 = vmatpush1.bf16.msra.mxu0 %v109
    %129 = vmatprep.subr.bf16.mxu0 0
    %130 = vmatpush1.bf16.msra.mxu0 %v110
    %131 = vmatprep.subr.bf16.mxu0 0
    %132 = vmatpush1.bf16.msra.mxu0 %v111
    %133 = vmatprep.subr.bf16.mxu0 0
    %134 = vmatpush1.bf16.msra.mxu0 %v112
    %135 = vmatprep.subr.bf16.mxu0 0
    %136 = vmatpush1.bf16.msra.mxu0 %v113
    %137 = vmatprep.subr.bf16.mxu0 0
    %138 = vmatpush1.bf16.msra.mxu0 %v114
    %139 = vmatprep.subr.bf16.mxu0 0
    %140 = vmatpush1.bf16.msra.mxu0 0
    %141 = vmatprep.subr.bf16.mxu0 0
    %142 = vmatpush1.bf16.msra.mxu0 0
    %143 = vmatprep.subr.bf16.mxu0 0
    %144 = vmatpush1.bf16.msra.mxu0 0
    %145 = vmatprep.subr.bf16.mxu0 0
    %146 = vmatpush1.bf16.msra.mxu0 0
    %147 = vmatprep.subr.bf16.mxu0 0
    %148 = vmatpush1.bf16.msra.mxu0 0
    %149 = vmatprep.subr.bf16.mxu0 0
    %150 = vmatpush1.bf16.msra.mxu0 0
    %151 = vmatprep.subr.bf16.mxu0 0
    %152 = vmatpush1.bf16.msra.mxu0 0
    %153 = vmatprep.subr.bf16.mxu0 0
    %154 = vmatpush1.bf16.msra.mxu0 0
    %155 = vmatprep.mubr.bf16.mxu0 0
    %156 = vmatmul.mubr.bf16.gmra.mrb[0].mxu0 %v73
    %v157 = vpop.f32.mrb[0].mxu0
    %v158 = vadd.f32 %v67, %v157
    %v159 = vpop.f32.mrb[0].mxu0
    %v160 = vpop.f32.mrb[0].mxu0
    %v161 = vadd.f32 %v67, %v160
    %v162 = vpop.f32.mrb[0].mxu0
    %163 = vdwg.mxu0
    %164 = vst [vmem:[#allocation7] sm:$0xff] %v158
    %165 = vst [vmem:[#allocation7 + $0x8] sm:$0xff] %v161
    // Predicated region
    $region22: #{_affine_padded.1} parent=1 // pred_check
      _
    $region23: #{_affine_padded.1} parent=1 // pred_check_branch
      %167 = sbr.rel (0) target = $region25
    $region24: #{_affine_padded.1} parent=1 // pred_region
      %s169 = ssub.s32 256, 256
      %170 = vsyncadd [#allocation4], %s169
      %s171 = sshll.u32 [#allocation7], 4
      %s172 = int_to_ptr.vmem [resolvable:$true] %s171
      %177 = dma.vmem_to_hbm [thread:$0]  %s172, 256, %s3, [#allocation4], 128, 128, 8
    $region25: #{_affine_padded.1} parent=1 // pred_fallthru
      _
    // Predicated region
    $region26: #{_affine_padded.1} parent=1 // pred_check
      _
    $region27: #{_affine_padded.1} parent=1 // pred_check_branch
      %179 = sbr.rel (0) target = $region29
    $region28: #{_affine_padded.1} parent=1 // pred_region
      %180 = dma.done [#allocation4], 256
    $region29: #{_affine_padded.1} parent=1 // pred_fallthru
      _
    %181 = vsyncpa [#allocation3], 1
    %182 = vsyncpa [#allocation6], 1
    %183 = vsyncpa [#allocation4], 1

</llo_original>
